<compile_context>
chip_gen: v7x
topology: tpu7x:2x2x1
jax: 0.10.0
libtpu: 0.0.40
codegen_flags: <defaults>
</compile_context>

<pallas_src>
import functools

import jax
import jax.numpy as jnp
from jax.experimental import pallas as pl
from jax.experimental.pallas import tpu as pltpu

_LANE = 128


def _flow_loss_kernel(pred_ref, gt_ref, valid_ref, part_ref, *, max_flow, n_channels):
    # pred_ref / gt_ref block: (1, C, S, 128); valid_ref block: (1, S, 128)
    p = pred_ref[0]                                  # (C, S, 128)
    g = gt_ref[0]                                    # (C, S, 128)
    v = valid_ref[0].astype(jnp.float32)             # (S, 128)

    absum = None   # sum_c |pred - gt|
    sqsum = None   # sum_c (pred - gt)^2
    magsq = None   # sum_c gt^2
    for c in range(n_channels):                      # C is small (2): unrolled VPU adds
        pc = p[c].astype(jnp.float32)                # (S, 128)
        gc = g[c].astype(jnp.float32)
        dc = pc - gc
        ab = jnp.abs(dc)
        sq = dc * dc
        mg = gc * gc
        if c == 0:
            absum, sqsum, magsq = ab, sq, mg
        else:
            absum = absum + ab
            sqsum = sqsum + sq
            magsq = magsq + mg

    mag = jnp.sqrt(magsq)                            # (S, 128)
    epe = jnp.sqrt(sqsum)                            # (S, 128)
    vf = jnp.where(jnp.logical_and(v >= 0.5, mag < max_flow),
                   jnp.float32(1.0), jnp.float32(0.0))

    def _fold(x):                                    # (S, 128) -> (1, 128) lane partials
        return jnp.sum(x, axis=0, keepdims=True)

    r_l1 = _fold(vf * absum)                          # masked L1 sum
    r_cnt = _fold(vf)                                 # number of valid pixels
    r_epe = _fold(vf * epe)                           # masked epe sum
    r_1px = _fold(jnp.where(epe < 1.0, vf, 0.0))
    r_3px = _fold(jnp.where(epe < 3.0, vf, 0.0))
    r_5px = _fold(jnp.where(epe < 5.0, vf, 0.0))
    zero = jnp.zeros_like(r_l1)

    packed = jnp.concatenate(
        [r_l1, r_cnt, r_epe, r_1px, r_3px, r_5px, zero, zero], axis=0)   # (8, 128)
    part_ref[...] = packed[None, None, :, :]         # lane-dense, unmasked store


def _round_up(x, m):
    return ((x + m - 1) // m) * m


def _choose_tile_pixels(n_channels, hw):
    # Keep 2 flow inputs x 2 pipeline buffers x C * tile * 4B well under VMEM
    # (v7x only has 64 MiB); cap at 32768 lanes (diminishing returns beyond).
    budget_bytes = 12 * 1024 * 1024
    cap = budget_bytes // (2 * 2 * 4 * n_channels)
    cap = max(8 * _LANE, (cap // (8 * _LANE)) * (8 * _LANE))   # multiple of (8, 128)
    cap = min(32768, cap)
    if hw <= cap:
        return _round_up(hw, _LANE)      # tiny problem: single spatial tile
    return cap


def flow_loss(flow_preds, flow_gt, valid, max_flow=400.0):
    """Pallas implementation of Flow_Loss.forward -> (flow_loss, metrics)."""
    B, C, H, W = flow_preds.shape
    assert flow_gt.shape == flow_preds.shape
    assert valid.shape == (B, H, W)
    hw = H * W

    tile_pixels = _choose_tile_pixels(C, hw)
    hw_pad = _round_up(hw, tile_pixels)
    num_tiles = hw_pad // tile_pixels
    s_tile = tile_pixels // _LANE
    s_total = hw_pad // _LANE

    preds = flow_preds.reshape(B, C, hw)
    gts = flow_gt.reshape(B, C, hw)
    vals = valid.reshape(B, hw)
    if hw_pad != hw:
        pad = hw_pad - hw
        preds = jnp.pad(preds, ((0, 0), (0, 0), (0, pad)))
        gts = jnp.pad(gts, ((0, 0), (0, 0), (0, pad)))
        vals = jnp.pad(vals, ((0, 0), (0, pad)))     # padded pixels: valid = 0
    preds = preds.reshape(B, C, s_total, _LANE)
    gts = gts.reshape(B, C, s_total, _LANE)
    vals = vals.reshape(B, s_total, _LANE)

    kernel = functools.partial(_flow_loss_kernel,
                               max_flow=float(max_flow), n_channels=C)

    partials = pl.pallas_call(
        kernel,
        out_shape=jax.ShapeDtypeStruct((B, num_tiles, 8, _LANE), jnp.float32),
        grid_spec=pltpu.PrefetchScalarGridSpec(
            num_scalar_prefetch=0,
            grid=(B, num_tiles),
            in_specs=[
                pl.BlockSpec((1, C, s_tile, _LANE), lambda b, t: (b, 0, t, 0)),
                pl.BlockSpec((1, C, s_tile, _LANE), lambda b, t: (b, 0, t, 0)),
                pl.BlockSpec((1, s_tile, _LANE), lambda b, t: (b, t, 0)),
            ],
            out_specs=pl.BlockSpec((1, 1, 8, _LANE), lambda b, t: (b, t, 0, 0)),
        ),
        compiler_params=pltpu.CompilerParams(
            dimension_semantics=("parallel", "parallel"),
            vmem_limit_bytes=32 * 1024 * 1024,
        ),
    )(preds, gts, vals)

    sums = jnp.sum(partials, axis=(0, 1, 3))         # (8,) tiny epilogue reduce
    flow_loss_val = sums[0] / jnp.float32(B * C * H * W)
    n_valid = sums[1]
    metrics = {
        'epe': sums[2] / n_valid,
        '1px': sums[3] / n_valid,
        '3px': sums[4] / n_valid,
        '5px': sums[5] / n_valid,
    }
    # TODO(synk): torch returns metrics via .item() (host floats); kept as JAX
    # scalars here so the wrapper stays jit-able.
    return flow_loss_val, metrics


if __name__ == "__main__":
    key = jax.random.PRNGKey(0)
    k1, k2, k3 = jax.random.split(key, 3)
    B, C, H, W = 2, 2, 16, 16            # optical flow: 2 channels
    flow_preds = jax.random.normal(k1, (B, C, H, W), dtype=jnp.float32) * 3.0
    flow_gt = jax.random.normal(k2, (B, C, H, W), dtype=jnp.float32) * 3.0
    # exercise the max_flow filter on a couple of pixels
    flow_gt = flow_gt.at[0, :, 0, 0].set(500.0)
    flow_gt = flow_gt.at[1, :, 3, 7].set(-450.0)
    valid = (jax.random.uniform(k3, (B, H, W)) > 0.3).astype(jnp.float32)

    loss, metrics = flow_loss(flow_preds, flow_gt, valid)
    loss = jax.block_until_ready(loss)

    # plain-JAX reference mirroring the PyTorch module
    mag = jnp.sqrt(jnp.sum(flow_gt ** 2, axis=1))
    vmask = jnp.logical_and(valid >= 0.5, mag < 400.0)
    i_loss = jnp.abs(flow_preds - flow_gt)
    ref_loss = jnp.mean(vmask[:, None].astype(jnp.float32) * i_loss)
    epe = jnp.sqrt(jnp.sum((flow_preds - flow_gt) ** 2, axis=1))
    vf = vmask.astype(jnp.float32)
    nv = jnp.sum(vf)
    ref_metrics = {
        'epe': jnp.sum(epe * vf) / nv,
        '1px': jnp.sum((epe < 1).astype(jnp.float32) * vf) / nv,
        '3px': jnp.sum((epe < 3).astype(jnp.float32) * vf) / nv,
        '5px': jnp.sum((epe < 5).astype(jnp.float32) * vf) / nv,
    }

    assert jnp.allclose(loss, ref_loss, rtol=1e-5, atol=1e-6), (loss, ref_loss)
    for k in ref_metrics:
        assert jnp.allclose(metrics[k], ref_metrics[k], rtol=1e-5, atol=1e-6), (
            k, metrics[k], ref_metrics[k])

    print("KERNEL_OK")
</pallas_src>

<mosaic_0001>
module attributes {stable_mosaic.version = 11 : i64} {
  func.func @_flow_loss_kernel(%arg0: i32, %arg1: i32, %arg2: memref<1x2x2x128xf32, #tpu.memory_space<vmem>>, %arg3: memref<1x2x2x128xf32, #tpu.memory_space<vmem>>, %arg4: memref<1x2x128xf32, #tpu.memory_space<vmem>>, %arg5: memref<1x1x8x128xf32, #tpu.memory_space<vmem>>) attributes {dimension_semantics = [#tpu.dimension_semantics<parallel>, #tpu.dimension_semantics<parallel>], iteration_bounds = array<i64: 2, 1>, scalar_prefetch = 0 : i64, scratch_operands = 0 : i64, tpu.core_type = #tpu.core_type<tc>, window_params = [{transform_indices = @transform_0, window_bounds = array<i64: 1, 2, 2, 128>}, {transform_indices = @transform_1, window_bounds = array<i64: 1, 2, 2, 128>}, {transform_indices = @transform_2, window_bounds = array<i64: 1, 2, 128>}, {transform_indices = @transform_3, window_bounds = array<i64: 1, 1, 8, 128>}]} {
    %c0 = arith.constant 0 : index
    %c0_0 = arith.constant 0 : index
    %c0_1 = arith.constant 0 : index
    %c0_2 = arith.constant 0 : index
    %0 = vector.load %arg2[%c0, %c0_0, %c0_1, %c0_2] : memref<1x2x2x128xf32, #tpu.memory_space<vmem>>, vector<1x2x2x128xf32>
    %1 = vector.shape_cast %0 : vector<1x2x2x128xf32> to vector<2x2x128xf32>
    %c0_3 = arith.constant 0 : index
    %c0_4 = arith.constant 0 : index
    %c0_5 = arith.constant 0 : index
    %c0_6 = arith.constant 0 : index
    %2 = vector.load %arg3[%c0_3, %c0_4, %c0_5, %c0_6] : memref<1x2x2x128xf32, #tpu.memory_space<vmem>>, vector<1x2x2x128xf32>
    %3 = vector.shape_cast %2 : vector<1x2x2x128xf32> to vector<2x2x128xf32>
    %c0_7 = arith.constant 0 : index
    %c0_8 = arith.constant 0 : index
    %c0_9 = arith.constant 0 : index
    %4 = vector.load %arg4[%c0_7, %c0_8, %c0_9] : memref<1x2x128xf32, #tpu.memory_space<vmem>>, vector<1x2x128xf32>
    %5 = vector.shape_cast %4 : vector<1x2x128xf32> to vector<2x128xf32>
    %6 = vector.extract_strided_slice %1 {offsets = [0, 0, 0], sizes = [1, 2, 128], strides = [1, 1, 1]} : vector<2x2x128xf32> to vector<1x2x128xf32>
    %7 = vector.shape_cast %6 : vector<1x2x128xf32> to vector<2x128xf32>
    %8 = vector.extract_strided_slice %3 {offsets = [0, 0, 0], sizes = [1, 2, 128], strides = [1, 1, 1]} : vector<2x2x128xf32> to vector<1x2x128xf32>
    %9 = vector.shape_cast %8 : vector<1x2x128xf32> to vector<2x128xf32>
    %10 = arith.subf %7, %9 : vector<2x128xf32>
    %11 = math.absf %10 : vector<2x128xf32>
    %12 = arith.mulf %10, %10 : vector<2x128xf32>
    %13 = arith.mulf %9, %9 : vector<2x128xf32>
    %14 = vector.extract_strided_slice %1 {offsets = [1, 0, 0], sizes = [1, 2, 128], strides = [1, 1, 1]} : vector<2x2x128xf32> to vector<1x2x128xf32>
    %15 = vector.shape_cast %14 : vector<1x2x128xf32> to vector<2x128xf32>
    %16 = vector.extract_strided_slice %3 {offsets = [1, 0, 0], sizes = [1, 2, 128], strides = [1, 1, 1]} : vector<2x2x128xf32> to vector<1x2x128xf32>
    %17 = vector.shape_cast %16 : vector<1x2x128xf32> to vector<2x128xf32>
    %18 = arith.subf %15, %17 : vector<2x128xf32>
    %19 = math.absf %18 : vector<2x128xf32>
    %20 = arith.mulf %18, %18 : vector<2x128xf32>
    %21 = arith.mulf %17, %17 : vector<2x128xf32>
    %22 = arith.addf %11, %19 : vector<2x128xf32>
    %23 = arith.addf %12, %20 : vector<2x128xf32>
    %24 = arith.addf %13, %21 : vector<2x128xf32>
    %25 = math.sqrt %24 : vector<2x128xf32>
    %26 = math.sqrt %23 : vector<2x128xf32>
    %cst = arith.constant 5.000000e-01 : f32
    %27 = vector.broadcast %cst : f32 to vector<2x128xf32>
    %28 = arith.cmpf oge, %5, %27 : vector<2x128xf32>
    %cst_10 = arith.constant 4.000000e+02 : f32
    %29 = vector.broadcast %cst_10 : f32 to vector<2x128xf32>
    %30 = arith.cmpf olt, %25, %29 : vector<2x128xf32>
    %31 = arith.andi %28, %30 : vector<2x128xi1>
    %cst_11 = arith.constant 1.000000e+00 : f32
    %cst_12 = arith.constant 0.000000e+00 : f32
    %32 = vector.broadcast %cst_11 : f32 to vector<2x128xf32>
    %33 = vector.broadcast %cst_12 : f32 to vector<2x128xf32>
    %34 = arith.select %31, %32, %33 : vector<2x128xi1>, vector<2x128xf32>
    %35 = arith.mulf %34, %22 : vector<2x128xf32>
    %cst_13 = arith.constant dense<0.000000e+00> : vector<128xf32>
    %36 = vector.multi_reduction <add>, %35, %cst_13 [0] : vector<2x128xf32> to vector<128xf32>
    %37 = vector.shape_cast %36 : vector<128xf32> to vector<1x128xf32>
    %cst_14 = arith.constant dense<0.000000e+00> : vector<128xf32>
    %38 = vector.multi_reduction <add>, %34, %cst_14 [0] : vector<2x128xf32> to vector<128xf32>
    %39 = vector.shape_cast %38 : vector<128xf32> to vector<1x128xf32>
    %40 = arith.mulf %34, %26 : vector<2x128xf32>
    %cst_15 = arith.constant dense<0.000000e+00> : vector<128xf32>
    %41 = vector.multi_reduction <add>, %40, %cst_15 [0] : vector<2x128xf32> to vector<128xf32>
    %42 = vector.shape_cast %41 : vector<128xf32> to vector<1x128xf32>
    %cst_16 = arith.constant 1.000000e+00 : f32
    %43 = vector.broadcast %cst_16 : f32 to vector<2x128xf32>
    %44 = arith.cmpf olt, %26, %43 : vector<2x128xf32>
    %cst_17 = arith.constant 0.000000e+00 : f32
    %45 = vector.broadcast %cst_17 : f32 to vector<2x128xf32>
    %46 = arith.select %44, %34, %45 : vector<2x128xi1>, vector<2x128xf32>
    %cst_18 = arith.constant dense<0.000000e+00> : vector<128xf32>
    %47 = vector.multi_reduction <add>, %46, %cst_18 [0] : vector<2x128xf32> to vector<128xf32>
    %48 = vector.shape_cast %47 : vector<128xf32> to vector<1x128xf32>
    %cst_19 = arith.constant 3.000000e+00 : f32
    %49 = vector.broadcast %cst_19 : f32 to vector<2x128xf32>
    %50 = arith.cmpf olt, %26, %49 : vector<2x128xf32>
    %cst_20 = arith.constant 0.000000e+00 : f32
    %51 = vector.broadcast %cst_20 : f32 to vector<2x128xf32>
    %52 = arith.select %50, %34, %51 : vector<2x128xi1>, vector<2x128xf32>
    %cst_21 = arith.constant dense<0.000000e+00> : vector<128xf32>
    %53 = vector.multi_reduction <add>, %52, %cst_21 [0] : vector<2x128xf32> to vector<128xf32>
    %54 = vector.shape_cast %53 : vector<128xf32> to vector<1x128xf32>
    %cst_22 = arith.constant 5.000000e+00 : f32
    %55 = vector.broadcast %cst_22 : f32 to vector<2x128xf32>
    %56 = arith.cmpf olt, %26, %55 : vector<2x128xf32>
    %cst_23 = arith.constant 0.000000e+00 : f32
    %57 = vector.broadcast %cst_23 : f32 to vector<2x128xf32>
    %58 = arith.select %56, %34, %57 : vector<2x128xi1>, vector<2x128xf32>
    %cst_24 = arith.constant dense<0.000000e+00> : vector<128xf32>
    %59 = vector.multi_reduction <add>, %58, %cst_24 [0] : vector<2x128xf32> to vector<128xf32>
    %60 = vector.shape_cast %59 : vector<128xf32> to vector<1x128xf32>
    %cst_25 = arith.constant 0.000000e+00 : f32
    %61 = vector.broadcast %cst_25 : f32 to vector<1x128xf32>
    %62 = tpu.concatenate %37, %39, %42, %48, %54, %60, %61, %61 in 0 : vector<1x128xf32>, vector<1x128xf32>, vector<1x128xf32>, vector<1x128xf32>, vector<1x128xf32>, vector<1x128xf32>, vector<1x128xf32>, vector<1x128xf32> -> vector<8x128xf32>
    %63 = vector.shape_cast %62 : vector<8x128xf32> to vector<1x1x8x128xf32>
    %c0_26 = arith.constant 0 : index
    %c0_27 = arith.constant 0 : index
    %c0_28 = arith.constant 0 : index
    %c0_29 = arith.constant 0 : index
    %64 = vector.load %arg5[%c0_26, %c0_27, %c0_28, %c0_29] : memref<1x1x8x128xf32, #tpu.memory_space<vmem>>, vector<1x1x8x128xf32>
    tpu.vector_store %arg5[%c0_26, %c0_27, %c0_28, %c0_29], %63 {strides = array<i32>} : memref<1x1x8x128xf32, #tpu.memory_space<vmem>>, vector<1x1x8x128xf32>,
    return
  }
  func.func @transform_0(%arg0: i32, %arg1: i32) -> (i32, i32, i32, i32) {
    %c0_i32 = arith.constant 0 : i32
    %c0_i32_0 = arith.constant 0 : i32
    %c0_i32_1 = arith.constant 0 : i32
    return %arg0, %c0_i32, %arg1, %c0_i32_0 : i32, i32, i32, i32
  }
  func.func @transform_1(%arg0: i32, %arg1: i32) -> (i32, i32, i32, i32) {
    %c0_i32 = arith.constant 0 : i32
    %c0_i32_0 = arith.constant 0 : i32
    %c0_i32_1 = arith.constant 0 : i32
    return %arg0, %c0_i32, %arg1, %c0_i32_0 : i32, i32, i32, i32
  }
  func.func @transform_2(%arg0: i32, %arg1: i32) -> (i32, i32, i32) {
    %c0_i32 = arith.constant 0 : i32
    %c0_i32_0 = arith.constant 0 : i32
    return %arg0, %arg1, %c0_i32 : i32, i32, i32
  }
  func.func @transform_3(%arg0: i32, %arg1: i32) -> (i32, i32, i32, i32) {
    %c0_i32 = arith.constant 0 : i32
    %c0_i32_0 = arith.constant 0 : i32
    %c0_i32_1 = arith.constant 0 : i32
    return %arg0, %arg1, %c0_i32, %c0_i32_0 : i32, i32, i32, i32
  }
}

</mosaic_0001>

<llo_original>
// kernel: tpu_custom_call.1
$region0: #{tpu_custom_call.1}
  #allocation0 [shape = 'u32[]', space=smem, size = 0x4, offset = 0x4, fixed_abs, tag = 'smem constant byte address 0x4 - core index']
  #allocation1 [shape = 'u32[144,128]{1,0:T(1,128)}', space=vmem, size = 0x12000, scoped, tag = 'internal scratch']
  %s0 = inlined_call_operand.hbm [shape: f32[2,2,2,128], index: 0, kind: input, shape index: {}]
  %s1 = inlined_call_operand.hbm [shape: f32[2,2,2,128], index: 1, kind: input, shape index: {}]
  %s2 = inlined_call_operand.vmem [shape: f32[2,2,128], index: 2, kind: input, shape index: {}]
  %s3 = inlined_call_operand.hbm [shape: f32[2,1,8,128], index: 3, kind: output, shape index: {}]
  %s4 = sld [smem:[#allocation0]]
  $region53: #{tpu_custom_call.1} parent=0
    _
  %s6 = ssub.s32 1, %s4
  %s7 = scalar_select 0, %s6, %s4
  $region1: #{tpu_custom_call.1} parent=0
    #allocation2 [shape = 'u8[4096]{0}', space=vmem, size = 0x1000, scoped, tag = 'input window, operand 0']
    #allocation3 [shape = 's32[2]{0}', space=sflag, size = 0x8, scoped, tag = 'scoped memory for tpu_custom_call.1']
    #allocation4 [shape = 's32[2]{0}', space=sflag, size = 0x8, scoped, tag = 'scoped memory for tpu_custom_call.1']
    #allocation5 [shape = 'u8[4096]{0}', space=vmem, size = 0x1000, scoped, tag = 'input window, operand 1']
    #allocation6 [shape = 's32[2]{0}', space=sflag, size = 0x8, scoped, tag = 'scoped memory for tpu_custom_call.1']
    #allocation7 [shape = 'u8[8192]{0}', space=vmem, size = 0x2000, scoped, tag = 'output window, operand 0']
    %8 = vsyncpa [#allocation3], 0
    %s9 = scalar_lea.sflag [#allocation3], 1
    %10 = vsyncpa %s9, 0
    %11 = vsyncpa [#allocation6], 0
    %s12 = scalar_lea.sflag [#allocation6], 1
    %13 = vsyncpa %s12, 0
    %14 = vsyncpa [#allocation4], 0
    %s15 = scalar_lea.sflag [#allocation4], 1
    %16 = vsyncpa %s15, 0
    loop: start=0, step=1, limit=4
    $region2: #{tpu_custom_call.1} parent=1 // loop_pre_header
      _
    $region3: #{tpu_custom_call.1} parent=1 // loop_header
      %s18 = sphi 0, %s22
      %p19 = scmp.ge.s32.totalorder %s18, 4
      %s25 = sphi 0, %s37
      %s26 = sphi 0, %s33
      %s27 = sphi 0, %s25
      %s28 = sphi 0, %s26
      %s29 = sphi 0, %s27
      %s30 = sphi 0, %s28
      %s42 = sphi 0, %s44
      %s45 = sphi 0, %s42
      %s46 = sphi 0, %s45
      %s62 = sphi 0, %s46
      %s70 = sphi 0, %s72
      %s73 = sphi 0, %s70
      %s74 = sphi 0, %s73
      %s90 = sphi 0, %s74
      %s98 = sphi 0, %s100
      %s101 = sphi 0, %s98
      %s102 = sphi 0, %s101
      %s118 = sphi 0, %s102
      %s126 = sphi 0, %s128
      %s129 = sphi 0, %s126
      %s130 = sphi 0, %s129
      %s146 = sphi 0, %s130
    $region4: #{tpu_custom_call.1} parent=1 // loop_header_branch
      %21 = sbr.rel (%p19) target = $region8
    $region5: #{tpu_custom_call.1} parent=1 // loop_body
      %s23 = ssub.s32 %s18, 1
      %s24 = ssub.s32 %s18, 2
      %s31 = sadd.s32 1, %s26
      %p32 = scmp.ge.s32.totalorder %s31, 1
      %s33 = scalar_select %p32, 0, %s31
      %s34 = sadd.s32 1, %s25
      %s35 = scalar_select %p32, %s34, %s25
      %p36 = scmp.ge.s32.totalorder %s35, 2
      %s37 = scalar_select %p36, 0, %s35
      %s38 = ssub.s32 %s25, %s37
      %s39 = ssub.s32 %s26, %s33
      %s40 = sor.u32 %s38, %s39
      %p41 = scmp.eq.s32.totalorder %s40, 0
      %s43 = sadd.s32 %s42, 1
      %s44 = scalar_select %p41, %s42, %s43
      %p47 = pneg %p41
      %p48 = scmp.eq.s32.totalorder %s18, 1
      %p49 = por %p47, %p48
      %p50 = scmp.ne.s32.totalorder %s42, %s45
      %p51 = scmp.eq.s32.totalorder %s18, 0
      %p52 = por %p50, %p51
      %p53 = scmp.ne.s32.totalorder %s42, %s45
      %p54 = scmp.eq.s32.totalorder %s23, 1
      %p55 = por %p53, %p54
      %p56 = scmp.ne.s32.totalorder %s45, %s46
      %p57 = scmp.eq.s32.totalorder %s23, 0
      %p58 = por %p56, %p57
      %p59 = scmp.ne.s32.totalorder %s45, %s46
      %p60 = scmp.eq.s32.totalorder %s24, 1
      %p61 = por %p59, %p60
      %p63 = scmp.ne.s32.totalorder %s46, %s62
      %p64 = scmp.eq.s32.totalorder %s24, 0
      %p65 = por %p63, %p64
      %s66 = ssub.s32 %s25, %s37
      %s67 = ssub.s32 %s26, %s33
      %s68 = sor.u32 %s66, %s67
      %p69 = scmp.eq.s32.totalorder %s68, 0
      %s71 = sadd.s32 %s70, 1
      %s72 = scalar_select %p69, %s70, %s71
      %p75 = pneg %p69
      %p76 = scmp.eq.s32.totalorder %s18, 1
      %p77 = por %p75, %p76
      %p78 = scmp.ne.s32.totalorder %s70, %s73
      %p79 = scmp.eq.s32.totalorder %s18, 0
      %p80 = por %p78, %p79
      %p81 = scmp.ne.s32.totalorder %s70, %s73
      %p82 = scmp.eq.s32.totalorder %s23, 1
      %p83 = por %p81, %p82
      %p84 = scmp.ne.s32.totalorder %s73, %s74
      %p85 = scmp.eq.s32.totalorder %s23, 0
      %p86 = por %p84, %p85
      %p87 = scmp.ne.s32.totalorder %s73, %s74
      %p88 = scmp.eq.s32.totalorder %s24, 1
      %p89 = por %p87, %p88
      %p91 = scmp.ne.s32.totalorder %s74, %s90
      %p92 = scmp.eq.s32.totalorder %s24, 0
      %p93 = por %p91, %p92
      %s94 = ssub.s32 %s25, %s37
      %s95 = ssub.s32 %s26, %s33
      %s96 = sor.u32 %s94, %s95
      %p97 = scmp.eq.s32.totalorder %s96, 0
      %s99 = sadd.s32 %s98, 1
      %s100 = scalar_select %p97, %s98, %s99
      %p103 = pneg %p97
      %p104 = scmp.eq.s32.totalorder %s18, 1
      %p105 = por %p103, %p104
      %p106 = scmp.ne.s32.totalorder %s98, %s101
      %p107 = scmp.eq.s32.totalorder %s18, 0
      %p108 = por %p106, %p107
      %p109 = scmp.ne.s32.totalorder %s98, %s101
      %p110 = scmp.eq.s32.totalorder %s23, 1
      %p111 = por %p109, %p110
      %p112 = scmp.ne.s32.totalorder %s101, %s102
      %p113 = scmp.eq.s32.totalorder %s23, 0
      %p114 = por %p112, %p113
      %p115 = scmp.ne.s32.totalorder %s101, %s102
      %p116 = scmp.eq.s32.totalorder %s24, 1
      %p117 = por %p115, %p116
      %p119 = scmp.ne.s32.totalorder %s102, %s118
      %p120 = scmp.eq.s32.totalorder %s24, 0
      %p121 = por %p119, %p120
      %s122 = ssub.s32 %s25, %s37
      %s123 = ssub.s32 %s26, %s33
      %s124 = sor.u32 %s122, %s123
      %p125 = scmp.eq.s32.totalorder %s124, 0
      %s127 = sadd.s32 %s126, 1
      %s128 = scalar_select %p125, %s126, %s127
      %p131 = pneg %p125
      %p132 = scmp.eq.s32.totalorder %s18, 1
      %p133 = por %p131, %p132
      %p134 = scmp.ne.s32.totalorder %s126, %s129
      %p135 = scmp.eq.s32.totalorder %s18, 0
      %p136 = por %p134, %p135
      %p137 = scmp.ne.s32.totalorder %s126, %s129
      %p138 = scmp.eq.s32.totalorder %s23, 1
      %p139 = por %p137, %p138
      %p140 = scmp.ne.s32.totalorder %s129, %s130
      %p141 = scmp.eq.s32.totalorder %s23, 0
      %p142 = por %p140, %p141
      %p143 = scmp.ne.s32.totalorder %s129, %s130
      %p144 = scmp.eq.s32.totalorder %s24, 1
      %p145 = por %p143, %p144
      %p147 = scmp.ne.s32.totalorder %s130, %s146
      %p148 = scmp.eq.s32.totalorder %s24, 0
      %p149 = por %p147, %p148
      %p150 = scmp.le.s32.totalorder 1, %s18
      %p151 = scmp.lt.s32.totalorder %s18, 3
      %p152 = pnand %p150, %p151
      %p153 = pneg %p152
      // Predicated region
      $region9: #{tpu_custom_call.1} parent=5 // pred_check
        _
      $region10: #{tpu_custom_call.1} parent=5 // pred_check_branch
        %155 = sbr.rel (%p152) target = $region12
      $region11: #{tpu_custom_call.1} parent=5 // pred_region
        %s156 = ssub.s32 %s18, 1
      $region12: #{tpu_custom_call.1} parent=5 // pred_fallthru
        _
      %p157 = scmp.lt.s32.totalorder %s18, 2
      // Predicated region
      $region13: #{tpu_custom_call.1} parent=5 // pred_check
        %p158 = pneg %p157
      $region14: #{tpu_custom_call.1} parent=5 // pred_check_branch
        %160 = sbr.rel (%p158) target = $region16
      $region15: #{tpu_custom_call.1} parent=5 // pred_region
        // Predicated region
        $region17: #{tpu_custom_call.1} parent=15 // pred_check
          %p161 = pneg %p52
        $region18: #{tpu_custom_call.1} parent=15 // pred_check_branch
          %163 = sbr.rel (%p161) target = $region20
        $region19: #{tpu_custom_call.1} parent=15 // pred_region
          %s164 = sand.u32 %s42, 1
          %s165 = scalar_lea.sflag [#allocation3], %s164
          %s166 = sand.u32 %s42, 1
          %s167 = smul.addr %s166, 4
          %s168 = scalar_lea.vmem [#allocation2], %s167
          %s170 = ssub.s32 64, 64
          %171 = vsyncadd %s165, %s170
          %s172 = smul.addr %s25, 2
          %s173 = sadd.s32 %s26, %s172
          %s174 = smul.addr %s173, 32
          %s175 = scalar_lea.hbm %s0, %s174
          %s176 = sshll.u32 %s168, 4
          %s177 = int_to_ptr.vmem [resolvable:$true] %s176
          %182 = dma.hbm_to_vmem [thread:$0]  %s175, 64, %s177, %s165, 32, 32, 2
        $region20: #{tpu_custom_call.1} parent=15 // pred_fallthru
          _
        // Predicated region
        $region21: #{tpu_custom_call.1} parent=15 // pred_check
          %p183 = pneg %p80
        $region22: #{tpu_custom_call.1} parent=15 // pred_check_branch
          %185 = sbr.rel (%p183) target = $region24
        $region23: #{tpu_custom_call.1} parent=15 // pred_region
          %s186 = sand.u32 %s70, 1
          %s187 = scalar_lea.sflag [#allocation6], %s186
          %s188 = sand.u32 %s70, 1
          %s189 = smul.addr %s188, 4
          %s190 = scalar_lea.vmem [#allocation5], %s189
          %s192 = ssub.s32 64, 64
          %193 = vsyncadd %s187, %s192
          %s194 = smul.addr %s25, 2
          %s195 = sadd.s32 %s26, %s194
          %s196 = smul.addr %s195, 32
          %s197 = scalar_lea.hbm %s1, %s196
          %s198 = sshll.u32 %s190, 4
          %s199 = int_to_ptr.vmem [resolvable:$true] %s198
          %204 = dma.hbm_to_vmem [thread:$0]  %s197, 64, %s199, %s187, 32, 32, 2
        $region24: #{tpu_custom_call.1} parent=15 // pred_fallthru
          _
        // Predicated region
        $region25: #{tpu_custom_call.1} parent=15 // pred_check
          %p205 = pneg %p108
        $region26: #{tpu_custom_call.1} parent=15 // pred_check_branch
          %207 = sbr.rel (%p205) target = $region28
        $region27: #{tpu_custom_call.1} parent=15 // pred_region
          %p208 = scmp.lt.s32.totalorder %s25, 1
          %s209 = scalar_select %p208, %s25, 1
          %p210 = scmp.lt.s32.totalorder %s26, 0
          %s211 = scalar_select %p210, %s26, 0
          %s212 = sadd.s32 %s211, %s209
          %s213 = smul.addr %s212, 2
          %s214 = scalar_lea.vmem %s2, %s213
        $region28: #{tpu_custom_call.1} parent=15 // pred_fallthru
          _
      $region16: #{tpu_custom_call.1} parent=5 // pred_fallthru
        _
      %p215 = scmp.le.s32.totalorder 1, %s18
      %p216 = scmp.lt.s32.totalorder %s18, 3
      %p217 = pnand %p215, %p216
      %p218 = pneg %p217
      // Predicated region
      $region29: #{tpu_custom_call.1} parent=5 // pred_check
        _
      $region30: #{tpu_custom_call.1} parent=5 // pred_check_branch
        %220 = sbr.rel (%p217) target = $region32
      $region31: #{tpu_custom_call.1} parent=5 // pred_region
        %s221 = ssub.s32 %s18, 1
        %s222 = sand.u32 %s45, 1
        %s223 = scalar_lea.sflag [#allocation3], %s222
        %s224 = sand.u32 %s45, 1
        %s225 = smul.addr %s224, 4
        %s226 = scalar_lea.vmem [#allocation2], %s225
        // Predicated region
        $region33: #{tpu_custom_call.1} parent=31 // pred_check
          %p227 = pneg %p58
        $region34: #{tpu_custom_call.1} parent=31 // pred_check_branch
          %229 = sbr.rel (%p227) target = $region36
        $region35: #{tpu_custom_call.1} parent=31 // pred_region
          %230 = dma.done %s223, 64
        $region36: #{tpu_custom_call.1} parent=31 // pred_fallthru
          _
        %s231 = sand.u32 %s73, 1
        %s232 = scalar_lea.sflag [#allocation6], %s231
        %s233 = sand.u32 %s73, 1
        %s234 = smul.addr %s233, 4
        %s235 = scalar_lea.vmem [#allocation5], %s234
        // Predicated region
        $region37: #{tpu_custom_call.1} parent=31 // pred_check
          %p236 = pneg %p86
        $region38: #{tpu_custom_call.1} parent=31 // pred_check_branch
          %238 = sbr.rel (%p236) target = $region40
        $region39: #{tpu_custom_call.1} parent=31 // pred_region
          %239 = dma.done %s232, 64
        $region40: #{tpu_custom_call.1} parent=31 // pred_fallthru
          _
        %s240 = sand.u32 %s45, 1
        %s241 = scalar_lea.sflag [#allocation3], %s240
        %s242 = sand.u32 %s45, 1
        %s243 = smul.addr %s242, 4
        %s244 = scalar_lea.vmem [#allocation2], %s243
        %p245 = pneg %p58
        %p246 = pneg %p55
        %s247 = sand.u32 %s73, 1
        %s248 = scalar_lea.sflag [#allocation6], %s247
        %s249 = sand.u32 %s73, 1
        %s250 = smul.addr %s249, 4
        %s251 = scalar_lea.vmem [#allocation5], %s250
        %p252 = pneg %p86
        %p253 = pneg %p83
        %p254 = scmp.lt.s32.totalorder %s27, 1
        %s255 = scalar_select %p254, %s27, 1
        %p256 = scmp.lt.s32.totalorder %s28, 0
        %s257 = scalar_select %p256, %s28, 0
        %s258 = sadd.s32 %s257, %s255
        %s259 = smul.addr %s258, 2
        %s260 = scalar_lea.vmem %s2, %s259
        %p261 = pneg %p114
        %p262 = pneg %p111
        %p263 = pneg %p142
        %p264 = pneg %p139
        %s265 = sand.u32 %s129, 1
        %s266 = scalar_lea.sflag [#allocation4], %s265
        %s267 = sand.u32 %s129, 1
        %s268 = smul.addr %s267, 8
        %s269 = scalar_lea.vmem [#allocation7], %s268
        %p270 = scmp.lt.s32.totalorder %s27, 1
        %s271 = scalar_select %p270, %s27, 1
        %p272 = scmp.lt.s32.totalorder %s28, 0
        %s273 = scalar_select %p272, %s28, 0
        %s274 = sadd.s32 %s273, %s271
        %s275 = smul.addr %s274, 2
        %s276 = scalar_lea.vmem %s2, %s275
        %v277 = vld [vmem:[%s226] sm:$0x3]
        %v278 = vld [vmem:[%s226 + $0x2] sm:$0x3]
        %v279 = vld [vmem:[%s235] sm:$0x3]
        %v280 = vld [vmem:[%s235 + $0x2] sm:$0x3]
        %v281 = vld [vmem:[%s276] sm:$0x3]
        %v282 = vsub.f32 %v277, %v279
        %v283 = vand.u32 2147483647, %v282
        %v284 = vmul.f32 %v282, %v282
        %v285 = vmul.f32 %v279, %v279
        %v286 = vsub.f32 %v278, %v280
        %v287 = vand.u32 2147483647, %v286
        %v288 = vmul.f32 %v286, %v286
        %v289 = vmul.f32 %v280, %v280
        %v290 = vadd.f32 %v283, %v287
        %v291 = vadd.f32 %v284, %v288
        %v292 = vadd.f32 %v285, %v289
        %v293 = vrsqrt.pop %v292
        %v294 = vmul.f32 %v292, %v293
        %vm295 = vcmp.eq.f32.partialorder %v292, inf
        %v296 = vsel %vm295, %v292, %v294
        %vm297 = vcmp.eq.f32.partialorder %v292, 0.0
        %v298 = vand.u32 %v292, 2147483648
        %v299 = vsel %vm297, %v298, %v296
        %v300 = vrsqrt.pop %v291
        %v301 = vmul.f32 %v291, %v300
        %vm302 = vcmp.eq.f32.partialorder %v291, inf
        %v303 = vsel %vm302, %v291, %v301
        %vm304 = vcmp.eq.f32.partialorder %v291, 0.0
        %v305 = vand.u32 %v291, 2147483648
        %v306 = vsel %vm304, %v305, %v303
        %vm307 = vcmp.ge.f32.partialorder %v281, 0.5
        %vm308 = vcmp.lt.f32.partialorder %v299, 400.0
        %vm309 = vmand %vm307, %vm308
        %v310 = vsel %vm309, 1.0, 0.0
        %v311 = vmul.f32 %v310, %v290
        %vm312 = vcmask 1041408
        %v313 = vsel %vm312, %v311, 0.0
        %v314 = vrot.slane %v313, 4
        %v315 = vadd.f32 %v313, %v314
        %v316 = vrot.slane %v315, 2
        %v317 = vadd.f32 %v315, %v316
        %v318 = vrot.slane %v317, 1
        %v319 = vadd.f32 %v317, %v318
        %v320 = vsel %vm312, %v310, 0.0
        %v321 = vrot.slane %v320, 4
        %v322 = vadd.f32 %v320, %v321
        %v323 = vrot.slane %v322, 2
        %v324 = vadd.f32 %v322, %v323
        %v325 = vrot.slane %v324, 1
        %v326 = vadd.f32 %v324, %v325
        %v327 = vmul.f32 %v310, %v306
        %v328 = vsel %vm312, %v327, 0.0
        %v329 = vrot.slane %v328, 4
        %v330 = vadd.f32 %v328, %v329
        %v331 = vrot.slane %v330, 2
        %v332 = vadd.f32 %v330, %v331
        %v333 = vrot.slane %v332, 1
        %v334 = vadd.f32 %v332, %v333
        %vm335 = vcmp.lt.f32.partialorder %v306, 1.0
        %v336 = vsel %vm335, %v310, 0.0
        %v337 = vsel %vm312, %v336, 0.0
        %v338 = vrot.slane %v337, 4
        %v339 = vadd.f32 %v337, %v338
        %v340 = vrot.slane %v339, 2
        %v341 = vadd.f32 %v339, %v340
        %v342 = vrot.slane %v341, 1
        %v343 = vadd.f32 %v341, %v342
        %vm344 = vcmp.lt.f32.partialorder %v306, 3.0
        %v345 = vsel %vm344, %v310, 0.0
        %v346 = vsel %vm312, %v345, 0.0
        %v347 = vrot.slane %v346, 4
        %v348 = vadd.f32 %v346, %v347
        %v349 = vrot.slane %v348, 2
        %v350 = vadd.f32 %v348, %v349
        %v351 = vrot.slane %v350, 1
        %v352 = vadd.f32 %v350, %v351
        %vm353 = vcmp.lt.f32.partialorder %v306, 5.0
        %v354 = vsel %vm353, %v310, 0.0
        %v355 = vsel %vm312, %v354, 0.0
        %v356 = vrot.slane %v355, 4
        %v357 = vadd.f32 %v355, %v356
        %v358 = vrot.slane %v357, 2
        %v359 = vadd.f32 %v357, %v358
        %v360 = vrot.slane %v359, 1
        %v361 = vadd.f32 %v359, %v360
        %vm362 = vcmask 1040384
        %v363 = vsel %vm362, %v319, %v326
        %v364 = vsel %vm312, %v363, %v334
        %vm365 = vcmask 1042432
        %v366 = vsel %vm365, %v364, %v343
        %vm367 = vcmask 1043456
        %v368 = vsel %vm367, %v366, %v352
        %vm369 = vcmask 1044480
        %v370 = vsel %vm369, %v368, %v361
        %vm371 = vcmask 1045504
        %v372 = vsel %vm371, %v370, 0.0
        %vm373 = vcmask 1046528
        %v374 = vsel %vm373, %v372, 0.0
        %375 = vst [vmem:[%s269] sm:$0xff] %v374
        %s376 = sand.u32 %s129, 1
        %s377 = scalar_lea.sflag [#allocation4], %s376
        %s378 = sand.u32 %s129, 1
        %s379 = smul.addr %s378, 8
        %s380 = scalar_lea.vmem [#allocation7], %s379
        // Predicated region
        $region41: #{tpu_custom_call.1} parent=31 // pred_check
          %p381 = pneg %p139
        $region42: #{tpu_custom_call.1} parent=31 // pred_check_branch
          %383 = sbr.rel (%p381) target = $region44
        $region43: #{tpu_custom_call.1} parent=31 // pred_region
          %s385 = ssub.s32 128, 128
          %386 = vsyncadd %s377, %s385
          %s387 = sadd.s32 %s28, %s27
          %s388 = smul.addr %s387, 128
          %s389 = scalar_lea.hbm %s3, %s388
          %s391 = sshll.u32 %s380, 4
          %s392 = int_to_ptr.vmem [resolvable:$true] %s391
          %394 = dma.vmem_to_hbm [thread:$0]  %s392, 128, %s389, %s377
        $region44: #{tpu_custom_call.1} parent=31 // pred_fallthru
          _
      $region32: #{tpu_custom_call.1} parent=5 // pred_fallthru
        _
      %p395 = scmp.le.s32.totalorder 2, %s18
      // Predicated region
      $region45: #{tpu_custom_call.1} parent=5 // pred_check
        %p396 = pneg %p395
      $region46: #{tpu_custom_call.1} parent=5 // pred_check_branch
        %398 = sbr.rel (%p396) target = $region48
      $region47: #{tpu_custom_call.1} parent=5 // pred_region
        %s399 = ssub.s32 %s18, 2
        // Predicated region
        $region49: #{tpu_custom_call.1} parent=47 // pred_check
          %p400 = pneg %p145
        $region50: #{tpu_custom_call.1} parent=47 // pred_check_branch
          %402 = sbr.rel (%p400) target = $region52
        $region51: #{tpu_custom_call.1} parent=47 // pred_region
          %s403 = sand.u32 %s130, 1
          %s404 = scalar_lea.sflag [#allocation4], %s403
          %s405 = sand.u32 %s130, 1
          %s406 = smul.addr %s405, 8
          %s407 = scalar_lea.vmem [#allocation7], %s406
          %408 = dma.done %s404, 128
        $region52: #{tpu_custom_call.1} parent=47 // pred_fallthru
          _
      $region48: #{tpu_custom_call.1} parent=5 // pred_fallthru
        _
    $region6: #{tpu_custom_call.1} parent=1 // loop_footer
      %s22 = sadd.s32 1, %s18
    $region7: #{tpu_custom_call.1} parent=1 // loop_footer_branch
      %17 = sbr.rel target = $region3
    $region8: #{tpu_custom_call.1} parent=1 // loop_exit
      _
    %409 = vsyncpa [#allocation3], 1
    %s410 = scalar_lea.sflag [#allocation3], 1
    %411 = vsyncpa %s410, 1
    %412 = vsyncpa [#allocation6], 1
    %s413 = scalar_lea.sflag [#allocation6], 1
    %414 = vsyncpa %s413, 1
    %415 = vsyncpa [#allocation4], 1
    %s416 = scalar_lea.sflag [#allocation4], 1
    %417 = vsyncpa %s416, 1

</llo_original>
